<compile_context>
chip_gen: v5e
topology: v5e:2x2
jax: 0.10.0
libtpu: 0.0.40
codegen_flags: <defaults>
</compile_context>

<pallas_src>
import functools
import math

import jax
import jax.numpy as jnp
from jax import lax
from jax.experimental import pallas as pl
from jax.experimental.pallas import tpu as pltpu


def _attn_kernel(x_ref, wqkv_ref, wp_ref, bp_ref, o_ref, qkv_s, ctx_s,
                 *, num_heads, bt, n_tok):
    """One grid step == `bt` batch elements x `n_tok` tokens (M = bt*n_tok rows).

    x_ref   : (M, C)   bf16 activation row-slab
    wqkv_ref: (C, 3C)  bf16 packed qkv weight (scale folded into q columns)
    wp_ref  : (C, C)   bf16 output-projection weight
    bp_ref  : (1, C)   f32  output-projection bias
    o_ref   : (M, C)   output (input dtype)
    qkv_s   : (M, 3C)  bf16 VMEM scratch: fused qkv projection
    ctx_s   : (M, C)   bf16 VMEM scratch: head-merged attention context
    """
    C = wp_ref.shape[0]
    hd = C // num_heads
    M = bt * n_tok

    # 1) Fused QKV projection: single (M, C) x (C, 3C) MXU pass.  Parked in a
    #    VMEM scratch so per-head windows are cheap static ref slices (no lane
    #    extracts from a live matmul value, bounded live ranges).
    qkv_s[...] = jnp.dot(x_ref[...], wqkv_ref[...],
                         preferred_element_type=jnp.float32).astype(qkv_s.dtype)

    # 2) Fold heads into the batch dim of the attention dot_generals/softmax.
    def gather_heads(col0):
        parts = [
            qkv_s[:, col0 + h * hd: col0 + (h + 1) * hd].reshape(bt, n_tok, hd)
            for h in range(num_heads)
        ]
        return jnp.concatenate(parts, axis=0)             # (heads*bt, n, hd)

    qh = gather_heads(0)
    kh = gather_heads(C)
    vh = gather_heads(2 * C)

    # Scores, batched over heads*bt (attention scale already folded into wq).
    s = lax.dot_general(qh, kh, (((2,), (2,)), ((0,), (0,))),
                        preferred_element_type=jnp.float32)   # (h*bt, n, n) f32

    # Softmax in f32; approximate reciprocal goes to the (otherwise idle) EUP.
    s = s - jnp.max(s, axis=-1, keepdims=True)
    e = jnp.exp(s)
    p = e * pl.reciprocal(jnp.sum(e, axis=-1, keepdims=True), approx=True)

    # attn @ V, batched over heads*bt.
    o = lax.dot_general(p.astype(jnp.bfloat16), vh, (((2,), (1,)), ((0,), (0,))),
                        preferred_element_type=jnp.float32)   # (h*bt, n, hd)
    o = o.astype(ctx_s.dtype)

    # Scatter each head back to its lane window -> contiguous (M, C) context
    # slab, enabling a single full-width output-projection matmul.
    for h in range(num_heads):
        ctx_s[:, h * hd:(h + 1) * hd] = o[h * bt:(h + 1) * bt].reshape(M, hd)

    # 3) Output projection + bias (attn_drop / proj_drop identity at p = 0.0).
    y = jnp.dot(ctx_s[...], wp_ref[...], preferred_element_type=jnp.float32)
    y = y + bp_ref[...]
    o_ref[...] = y.astype(o_ref.dtype)


def _pick_batch_tile(B, n_tok, C, num_heads, *, row_target=512):
    """Batch elements per grid step.

    Policy (perf review): reach >= `row_target` MXU rows per step (>=256 for
    v6e/v7x, amortizes ~0.35us/step overhead), keep >=2 grid steps when the
    problem is big enough (DMA/compute overlap + v7x 2-TensorCore sharding),
    and cap the per-step footprint so slabs stay inside v7x's 64 MiB VMEM.
    """
    divisors = [d for d in range(1, B + 1) if B % d == 0]
    bt = next((d for d in divisors if d * n_tok >= row_target), B)
    if bt == B and B > 1 and B * n_tok >= 2 * row_target:
        bt = max(d for d in divisors if d < B)            # keep >= 2 grid steps
    # Per-batch-element per-step bytes: double-buffered bf16 x block + f32 out
    # block, bf16 qkv/ctx scratches, live f32 scores.
    bytes_per_b = n_tok * (2 * C * 2 * 2 + C * 4 * 2 + 4 * C * 2
                           + num_heads * n_tok * 4)
    while bt > 1 and bt * bytes_per_b > (8 << 20):
        bt = max(d for d in divisors if d < bt)
    # Pallas constraint: a partial block's 2nd-minor dim must be 8-divisible.
    if (B // bt) > 1 and (bt * n_tok) % 8 != 0:
        aligned = [d for d in divisors if d >= bt and (d * n_tok) % 8 == 0]
        bt = aligned[0] if aligned else B
        # TODO(synk): pad the token slab instead of growing the batch tile.
    return bt


def global_sparse_attn(x, w_qkv, w_proj, b_proj, *, num_heads, sr_ratio):
    """x: (B, N, C) f32.  w_qkv: (C, 3C), w_proj: (C, C) (torch weight.T), b_proj: (C,)."""
    B, N, C = x.shape
    H = W = int(math.isqrt(N))
    assert H * W == N, "sequence length must be a perfect square"
    assert C % num_heads == 0

    if sr_ratio > 1:
        # AvgPool2d(kernel_size=1, stride=sr) in NCHW == pure strided subsample.
        xs = x.reshape(B, H, W, C)[:, ::sr_ratio, ::sr_ratio, :]
        xs = xs.reshape(B, -1, C)
    else:
        xs = x
    Np = xs.shape[1]

    hd = C // num_heads
    scale = hd ** -0.5

    bt = _pick_batch_tile(B, Np, C, num_heads)
    num_blocks = B // bt
    M = bt * Np

    # Contiguous flat token-row slab; bf16 MXU operands (halves activation DMA).
    x_flat = xs.reshape(B * Np, C).astype(jnp.bfloat16)

    # Single packed qkv weight with the attention scale folded into the q
    # columns (zero in-kernel cost) + single proj weight + (1, C) bias:
    # 4 inputs / DMA descriptors per step instead of 6.
    wqkv = jnp.concatenate([w_qkv[:, :C] * scale, w_qkv[:, C:]], axis=1)
    wqkv = wqkv.astype(jnp.bfloat16)
    wp = w_proj.astype(jnp.bfloat16)
    bp = b_proj.reshape(1, C).astype(jnp.float32)

    kernel = functools.partial(_attn_kernel, num_heads=num_heads, bt=bt, n_tok=Np)

    # TODO(synk): for production-sized Np the dense (heads*bt, Np, Np) score
    # tensor should become a flash-style online-softmax KV loop sized against
    # v7x's 64 MiB VMEM; at this module's sizes the dense form fits trivially.
    out = pl.pallas_call(
        kernel,
        out_shape=jax.ShapeDtypeStruct((B * Np, C), x.dtype),
        grid=(num_blocks,),
        in_specs=[
            pl.BlockSpec((M, C), lambda b: (b, 0)),        # activation row-slab
            pl.BlockSpec((C, 3 * C), lambda b: (0, 0)),    # packed qkv weight
            pl.BlockSpec((C, C), lambda b: (0, 0)),        # proj weight
            pl.BlockSpec((1, C), lambda b: (0, 0)),        # proj bias
        ],
        out_specs=pl.BlockSpec((M, C), lambda b: (b, 0)),
        scratch_shapes=[
            pltpu.VMEM((M, 3 * C), jnp.bfloat16),          # fused qkv slab
            pltpu.VMEM((M, C), jnp.bfloat16),              # head-merged context
        ],
        compiler_params=pltpu.CompilerParams(
            dimension_semantics=("parallel",)),
    )(x_flat, wqkv, wp, bp)

    return out.reshape(B, Np, C)


def _reference(x, w_qkv, w_proj, b_proj, *, num_heads, sr_ratio):
    """Pure-JAX f32 reference mirroring the PyTorch forward."""
    B, N, C = x.shape
    H = W = int(math.isqrt(N))
    if sr_ratio > 1:
        x = x.reshape(B, H, W, C)[:, ::sr_ratio, ::sr_ratio, :].reshape(B, -1, C)
    Np = x.shape[1]
    hd = C // num_heads
    scale = hd ** -0.5
    qkv = x @ w_qkv                                      # (B, Np, 3C)
    qkv = qkv.reshape(B, Np, 3, num_heads, hd).transpose(2, 0, 3, 1, 4)
    q, k, v = qkv[0], qkv[1], qkv[2]                     # (B, h, Np, hd)
    attn = (q @ jnp.swapaxes(k, -2, -1)) * scale
    attn = jax.nn.softmax(attn, axis=-1)
    o = (attn @ v).transpose(0, 2, 1, 3).reshape(B, Np, C)
    return o @ w_proj + b_proj


if __name__ == "__main__":
    # Small shapes consistent with the module: dim=32, 4 heads, 8x8 tokens, sr=2.
    B, C = 2, 32
    num_heads = 4
    H = W = 8
    N = H * W
    sr_ratio = 2

    key = jax.random.PRNGKey(0)
    kx, kqkv, kproj, kb = jax.random.split(key, 4)

    x = jax.random.normal(kx, (B, N, C), dtype=jnp.float32)
    # nn.Linear(dim, 3*dim, bias=False): stored transposed as (C, 3C) for x @ W.
    w_qkv = jax.random.normal(kqkv, (C, 3 * C), dtype=jnp.float32) * (1.0 / math.sqrt(C))
    # nn.Linear(dim, dim) with bias.
    w_proj = jax.random.normal(kproj, (C, C), dtype=jnp.float32) * (1.0 / math.sqrt(C))
    b_proj = jax.random.normal(kb, (C,), dtype=jnp.float32) * 0.01

    out = global_sparse_attn(x, w_qkv, w_proj, b_proj,
                             num_heads=num_heads, sr_ratio=sr_ratio)
    out = jax.block_until_ready(out)

    ref = _reference(x, w_qkv, w_proj, b_proj,
                     num_heads=num_heads, sr_ratio=sr_ratio)
    assert out.shape == (B, (H // sr_ratio) * (W // sr_ratio), C)
    # bf16 matmul operands + approx reciprocal -> loose agreement vs f32 reference.
    assert jnp.allclose(out, ref, rtol=5e-2, atol=5e-2), "mismatch vs reference"

    print("KERNEL_OK")
</pallas_src>

<mosaic_0001>
module attributes {stable_mosaic.version = 11 : i64} {
  func.func @_attn_kernel(%arg0: i32, %arg1: memref<32x32xbf16, #tpu.memory_space<vmem>>, %arg2: memref<32x96xbf16, #tpu.memory_space<vmem>>, %arg3: memref<32x32xbf16, #tpu.memory_space<vmem>>, %arg4: memref<1x32xf32, #tpu.memory_space<vmem>>, %arg5: memref<32x32xf32, #tpu.memory_space<vmem>>, %arg6: memref<32x96xbf16, #tpu.memory_space<vmem>>, %arg7: memref<32x32xbf16, #tpu.memory_space<vmem>>) attributes {dimension_semantics = [#tpu.dimension_semantics<parallel>], iteration_bounds = array<i64: 1>, scalar_prefetch = 0 : i64, scratch_operands = 2 : i64, tpu.core_type = #tpu.core_type<tc>, window_params = [{transform_indices = @transform_0, window_bounds = array<i64: 32, 32>}, {pipeline_mode = #tpu.pipeline_mode<synchronous>, transform_indices = @transform_1, window_bounds = array<i64: 32, 96>}, {pipeline_mode = #tpu.pipeline_mode<synchronous>, transform_indices = @transform_2, window_bounds = array<i64: 32, 32>}, {pipeline_mode = #tpu.pipeline_mode<synchronous>, transform_indices = @transform_3, window_bounds = array<i64: 1, 32>}, {transform_indices = @transform_4, window_bounds = array<i64: 32, 32>}]} {
    %c0 = arith.constant 0 : index
    %c0_0 = arith.constant 0 : index
    %0 = vector.load %arg1[%c0, %c0_0] : memref<32x32xbf16, #tpu.memory_space<vmem>>, vector<32x32xbf16>
    %c0_1 = arith.constant 0 : index
    %c0_2 = arith.constant 0 : index
    %1 = vector.load %arg2[%c0_1, %c0_2] : memref<32x96xbf16, #tpu.memory_space<vmem>>, vector<32x96xbf16>
    %cst = arith.constant dense<0.000000e+00> : vector<32x96xf32>
    %2 = tpu.matmul %0, %1, %cst {dimension_numbers = #tpu.dot_dimension_numbers<[1], [0], [0], [1], [0, 0, 1, 1], [], []>} : vector<32x32xbf16>, vector<32x96xbf16>, vector<32x96xf32> -> vector<32x96xf32>
    %3 = arith.truncf %2 : vector<32x96xf32> to vector<32x96xbf16>
    %c0_3 = arith.constant 0 : index
    %c0_4 = arith.constant 0 : index
    %4 = vector.load %arg6[%c0_3, %c0_4] : memref<32x96xbf16, #tpu.memory_space<vmem>>, vector<32x96xbf16>
    tpu.vector_store %arg6[%c0_3, %c0_4], %3 {strides = array<i32>} : memref<32x96xbf16, #tpu.memory_space<vmem>>, vector<32x96xbf16>,
    %c0_5 = arith.constant 0 : index
    %c0_6 = arith.constant 0 : index
    %5 = vector.load %arg6[%c0_5, %c0_6] : memref<32x96xbf16, #tpu.memory_space<vmem>>, vector<32x8xbf16>
    %6 = vector.shape_cast %5 : vector<32x8xbf16> to vector<2x16x8xbf16>
    %c0_7 = arith.constant 0 : index
    %c8 = arith.constant 8 : index
    %7 = vector.load %arg6[%c0_7, %c8] : memref<32x96xbf16, #tpu.memory_space<vmem>>, vector<32x8xbf16>
    %8 = vector.shape_cast %7 : vector<32x8xbf16> to vector<2x16x8xbf16>
    %c0_8 = arith.constant 0 : index
    %c16 = arith.constant 16 : index
    %9 = vector.load %arg6[%c0_8, %c16] : memref<32x96xbf16, #tpu.memory_space<vmem>>, vector<32x8xbf16>
    %10 = vector.shape_cast %9 : vector<32x8xbf16> to vector<2x16x8xbf16>
    %c0_9 = arith.constant 0 : index
    %c24 = arith.constant 24 : index
    %11 = vector.load %arg6[%c0_9, %c24] : memref<32x96xbf16, #tpu.memory_space<vmem>>, vector<32x8xbf16>
    %12 = vector.shape_cast %11 : vector<32x8xbf16> to vector<2x16x8xbf16>
    %13 = tpu.concatenate %6, %8, %10, %12 in 0 : vector<2x16x8xbf16>, vector<2x16x8xbf16>, vector<2x16x8xbf16>, vector<2x16x8xbf16> -> vector<8x16x8xbf16>
    %c0_10 = arith.constant 0 : index
    %c32 = arith.constant 32 : index
    %14 = vector.load %arg6[%c0_10, %c32] : memref<32x96xbf16, #tpu.memory_space<vmem>>, vector<32x8xbf16>
    %15 = vector.shape_cast %14 : vector<32x8xbf16> to vector<2x16x8xbf16>
    %c0_11 = arith.constant 0 : index
    %c40 = arith.constant 40 : index
    %16 = vector.load %arg6[%c0_11, %c40] : memref<32x96xbf16, #tpu.memory_space<vmem>>, vector<32x8xbf16>
    %17 = vector.shape_cast %16 : vector<32x8xbf16> to vector<2x16x8xbf16>
    %c0_12 = arith.constant 0 : index
    %c48 = arith.constant 48 : index
    %18 = vector.load %arg6[%c0_12, %c48] : memref<32x96xbf16, #tpu.memory_space<vmem>>, vector<32x8xbf16>
    %19 = vector.shape_cast %18 : vector<32x8xbf16> to vector<2x16x8xbf16>
    %c0_13 = arith.constant 0 : index
    %c56 = arith.constant 56 : index
    %20 = vector.load %arg6[%c0_13, %c56] : memref<32x96xbf16, #tpu.memory_space<vmem>>, vector<32x8xbf16>
    %21 = vector.shape_cast %20 : vector<32x8xbf16> to vector<2x16x8xbf16>
    %22 = tpu.concatenate %15, %17, %19, %21 in 0 : vector<2x16x8xbf16>, vector<2x16x8xbf16>, vector<2x16x8xbf16>, vector<2x16x8xbf16> -> vector<8x16x8xbf16>
    %c0_14 = arith.constant 0 : index
    %c64 = arith.constant 64 : index
    %23 = vector.load %arg6[%c0_14, %c64] : memref<32x96xbf16, #tpu.memory_space<vmem>>, vector<32x8xbf16>
    %24 = vector.shape_cast %23 : vector<32x8xbf16> to vector<2x16x8xbf16>
    %c0_15 = arith.constant 0 : index
    %c72 = arith.constant 72 : index
    %25 = vector.load %arg6[%c0_15, %c72] : memref<32x96xbf16, #tpu.memory_space<vmem>>, vector<32x8xbf16>
    %26 = vector.shape_cast %25 : vector<32x8xbf16> to vector<2x16x8xbf16>
    %c0_16 = arith.constant 0 : index
    %c80 = arith.constant 80 : index
    %27 = vector.load %arg6[%c0_16, %c80] : memref<32x96xbf16, #tpu.memory_space<vmem>>, vector<32x8xbf16>
    %28 = vector.shape_cast %27 : vector<32x8xbf16> to vector<2x16x8xbf16>
    %c0_17 = arith.constant 0 : index
    %c88 = arith.constant 88 : index
    %29 = vector.load %arg6[%c0_17, %c88] : memref<32x96xbf16, #tpu.memory_space<vmem>>, vector<32x8xbf16>
    %30 = vector.shape_cast %29 : vector<32x8xbf16> to vector<2x16x8xbf16>
    %31 = tpu.concatenate %24, %26, %28, %30 in 0 : vector<2x16x8xbf16>, vector<2x16x8xbf16>, vector<2x16x8xbf16>, vector<2x16x8xbf16> -> vector<8x16x8xbf16>
    %cst_18 = arith.constant dense<0.000000e+00> : vector<8x16x16xf32>
    %32 = tpu.matmul %13, %22, %cst_18 {dimension_numbers = #tpu.dot_dimension_numbers<[2], [2], [1], [1], [0, 0, 0, 1, 1, 1], [0], [0]>} : vector<8x16x8xbf16>, vector<8x16x8xbf16>, vector<8x16x16xf32> -> vector<8x16x16xf32>
    %cst_19 = arith.constant dense<0xFF800000> : vector<8x16xf32>
    %33 = vector.multi_reduction <maximumf>, %32, %cst_19 [2] : vector<8x16x16xf32> to vector<8x16xf32>
    %34 = vector.shape_cast %33 : vector<8x16xf32> to vector<8x16x1xf32>
    %35 = vector.broadcast %34 : vector<8x16x1xf32> to vector<8x16x16xf32>
    %36 = arith.subf %32, %35 : vector<8x16x16xf32>
    %37 = math.exp %36 : vector<8x16x16xf32>
    %cst_20 = arith.constant dense<0.000000e+00> : vector<8x16xf32>
    %38 = vector.multi_reduction <add>, %37, %cst_20 [2] : vector<8x16x16xf32> to vector<8x16xf32>
    %39 = vector.shape_cast %38 : vector<8x16xf32> to vector<8x16x1xf32>
    %40 = tpu.reciprocal %39 {approx = true} : vector<8x16x1xf32> -> vector<8x16x1xf32>
    %41 = vector.broadcast %40 : vector<8x16x1xf32> to vector<8x16x16xf32>
    %42 = arith.mulf %37, %41 : vector<8x16x16xf32>
    %43 = arith.truncf %42 : vector<8x16x16xf32> to vector<8x16x16xbf16>
    %cst_21 = arith.constant dense<0.000000e+00> : vector<8x16x8xf32>
    %44 = tpu.matmul %43, %31, %cst_21 {dimension_numbers = #tpu.dot_dimension_numbers<[2], [1], [1], [2], [0, 0, 0, 1, 1, 2], [0], [0]>} : vector<8x16x16xbf16>, vector<8x16x8xbf16>, vector<8x16x8xf32> -> vector<8x16x8xf32>
    %45 = arith.truncf %44 : vector<8x16x8xf32> to vector<8x16x8xbf16>
    %46 = vector.extract_strided_slice %45 {offsets = [0, 0, 0], sizes = [2, 16, 8], strides = [1, 1, 1]} : vector<8x16x8xbf16> to vector<2x16x8xbf16>
    %47 = vector.shape_cast %46 : vector<2x16x8xbf16> to vector<32x8xbf16>
    %c0_22 = arith.constant 0 : index
    %c0_23 = arith.constant 0 : index
    %48 = vector.load %arg7[%c0_22, %c0_23] : memref<32x32xbf16, #tpu.memory_space<vmem>>, vector<32x8xbf16>
    tpu.vector_store %arg7[%c0_22, %c0_23], %47 {strides = array<i32>} : memref<32x32xbf16, #tpu.memory_space<vmem>>, vector<32x8xbf16>,
    %49 = vector.extract_strided_slice %45 {offsets = [2, 0, 0], sizes = [2, 16, 8], strides = [1, 1, 1]} : vector<8x16x8xbf16> to vector<2x16x8xbf16>
    %50 = vector.shape_cast %49 : vector<2x16x8xbf16> to vector<32x8xbf16>
    %c0_24 = arith.constant 0 : index
    %c8_25 = arith.constant 8 : index
    %51 = vector.load %arg7[%c0_24, %c8_25] : memref<32x32xbf16, #tpu.memory_space<vmem>>, vector<32x8xbf16>
    tpu.vector_store %arg7[%c0_24, %c8_25], %50 {strides = array<i32>} : memref<32x32xbf16, #tpu.memory_space<vmem>>, vector<32x8xbf16>,
    %52 = vector.extract_strided_slice %45 {offsets = [4, 0, 0], sizes = [2, 16, 8], strides = [1, 1, 1]} : vector<8x16x8xbf16> to vector<2x16x8xbf16>
    %53 = vector.shape_cast %52 : vector<2x16x8xbf16> to vector<32x8xbf16>
    %c0_26 = arith.constant 0 : index
    %c16_27 = arith.constant 16 : index
    %54 = vector.load %arg7[%c0_26, %c16_27] : memref<32x32xbf16, #tpu.memory_space<vmem>>, vector<32x8xbf16>
    tpu.vector_store %arg7[%c0_26, %c16_27], %53 {strides = array<i32>} : memref<32x32xbf16, #tpu.memory_space<vmem>>, vector<32x8xbf16>,
    %55 = vector.extract_strided_slice %45 {offsets = [6, 0, 0], sizes = [2, 16, 8], strides = [1, 1, 1]} : vector<8x16x8xbf16> to vector<2x16x8xbf16>
    %56 = vector.shape_cast %55 : vector<2x16x8xbf16> to vector<32x8xbf16>
    %c0_28 = arith.constant 0 : index
    %c24_29 = arith.constant 24 : index
    %57 = vector.load %arg7[%c0_28, %c24_29] : memref<32x32xbf16, #tpu.memory_space<vmem>>, vector<32x8xbf16>
    tpu.vector_store %arg7[%c0_28, %c24_29], %56 {strides = array<i32>} : memref<32x32xbf16, #tpu.memory_space<vmem>>, vector<32x8xbf16>,
    %c0_30 = arith.constant 0 : index
    %c0_31 = arith.constant 0 : index
    %58 = vector.load %arg7[%c0_30, %c0_31] : memref<32x32xbf16, #tpu.memory_space<vmem>>, vector<32x32xbf16>
    %c0_32 = arith.constant 0 : index
    %c0_33 = arith.constant 0 : index
    %59 = vector.load %arg3[%c0_32, %c0_33] : memref<32x32xbf16, #tpu.memory_space<vmem>>, vector<32x32xbf16>
    %cst_34 = arith.constant dense<0.000000e+00> : vector<32x32xf32>
    %60 = tpu.matmul %58, %59, %cst_34 {dimension_numbers = #tpu.dot_dimension_numbers<[1], [0], [0], [1], [0, 0, 1, 1], [], []>} : vector<32x32xbf16>, vector<32x32xbf16>, vector<32x32xf32> -> vector<32x32xf32>
    %c0_35 = arith.constant 0 : index
    %c0_36 = arith.constant 0 : index
    %61 = vector.load %arg4[%c0_35, %c0_36] : memref<1x32xf32, #tpu.memory_space<vmem>>, vector<1x32xf32>
    %62 = vector.broadcast %61 : vector<1x32xf32> to vector<32x32xf32>
    %63 = arith.addf %60, %62 : vector<32x32xf32>
    %c0_37 = arith.constant 0 : index
    %c0_38 = arith.constant 0 : index
    %64 = vector.load %arg5[%c0_37, %c0_38] : memref<32x32xf32, #tpu.memory_space<vmem>>, vector<32x32xf32>
    tpu.vector_store %arg5[%c0_37, %c0_38], %63 {strides = array<i32>} : memref<32x32xf32, #tpu.memory_space<vmem>>, vector<32x32xf32>,
    return
  }
  func.func @transform_0(%arg0: i32) -> (i32, i32) {
    %c0_i32 = arith.constant 0 : i32
    %c0_i32_0 = arith.constant 0 : i32
    return %arg0, %c0_i32 : i32, i32
  }
  func.func @transform_1(%arg0: i32) -> (i32, i32) {
    %c0_i32 = arith.constant 0 : i32
    %c0_i32_0 = arith.constant 0 : i32
    %c0_i32_1 = arith.constant 0 : i32
    return %c0_i32, %c0_i32_0 : i32, i32
  }
  func.func @transform_2(%arg0: i32) -> (i32, i32) {
    %c0_i32 = arith.constant 0 : i32
    %c0_i32_0 = arith.constant 0 : i32
    %c0_i32_1 = arith.constant 0 : i32
    return %c0_i32, %c0_i32_0 : i32, i32
  }
  func.func @transform_3(%arg0: i32) -> (i32, i32) {
    %c0_i32 = arith.constant 0 : i32
    %c0_i32_0 = arith.constant 0 : i32
    %c0_i32_1 = arith.constant 0 : i32
    return %c0_i32, %c0_i32_0 : i32, i32
  }
  func.func @transform_4(%arg0: i32) -> (i32, i32) {
    %c0_i32 = arith.constant 0 : i32
    %c0_i32_0 = arith.constant 0 : i32
    return %arg0, %c0_i32 : i32, i32
  }
}

</mosaic_0001>

<llo_original>
// kernel: tpu_custom_call.1
$region0: #{tpu_custom_call.1}
  #allocation0 [shape = 'u32[]', space=smem, size = 0x4, offset = 0x4, fixed_abs, tag = 'smem constant byte address 0x4 - core index']
  #allocation1 [shape = 'u32[72,128]{1,0:T(1,128)}', space=vmem, size = 0x9000, scoped, tag = 'internal scratch']
  #allocation2 [shape = 'bf16[32,96]{1,0:T(8,128)(2,1)}', space=vmem, size = 0x2000, scoped, tag = 'scratch operand']
  #allocation3 [shape = 'bf16[32,32]{1,0:T(8,128)(2,1)}', space=vmem, size = 0x2000, scoped, tag = 'scratch operand']
  %s0 = inlined_call_operand.hbm [shape: bf16[32,32], index: 0, kind: input, shape index: {}]
  %s1 = inlined_call_operand.hbm [shape: bf16[32,96], index: 1, kind: input, shape index: {}]
  %s2 = inlined_call_operand.hbm [shape: bf16[32,32], index: 2, kind: input, shape index: {}]
  %s3 = inlined_call_operand.vmem [shape: f32[1,32], index: 3, kind: input, shape index: {}]
  %s4 = inlined_call_operand.hbm [shape: f32[32,32], index: 4, kind: output, shape index: {}]
  %s5 = sld [smem:[#allocation0]]
  $region38: #{tpu_custom_call.1} parent=0
    _
  %s7 = ssub.s32 1, %s5
  %s8 = scalar_select 0, %s7, %s5
  $region1: #{tpu_custom_call.1} parent=0
    #allocation4 [shape = 'u8[8192]{0}', space=vmem, size = 0x2000, scoped, tag = 'input window, operand 0, single buffered']
    #allocation5 [shape = 's32[1]{0}', space=sflag, size = 0x4, scoped, tag = 'scoped memory for tpu_custom_call.1']
    #allocation6 [shape = 's32[1]{0}', space=sflag, size = 0x4, scoped, tag = 'scoped memory for tpu_custom_call.1']
    #allocation7 [shape = 'u8[8192]{0}', space=vmem, size = 0x2000, scoped, tag = 'input window, operand 1, single buffered']
    #allocation8 [shape = 's32[1]{0}', space=sflag, size = 0x4, scoped, tag = 'scoped memory for tpu_custom_call.1']
    #allocation9 [shape = 'u8[8192]{0}', space=vmem, size = 0x2000, scoped, tag = 'input window, operand 2, single buffered']
    #allocation10 [shape = 'u8[16384]{0}', space=vmem, size = 0x4000, scoped, tag = 'output window, operand 0, single buffered']
    %9 = vsyncpa [#allocation5], 0
    %10 = vsyncpa [#allocation8], 0
    %11 = vsyncpa [#allocation6], 0
    // Predicated region
    $region2: #{tpu_custom_call.1} parent=1 // pred_check
      _
    $region3: #{tpu_custom_call.1} parent=1 // pred_check_branch
      %13 = sbr.rel (0) target = $region5
    $region4: #{tpu_custom_call.1} parent=1 // pred_region
      %15 = vsyncadd [#allocation5], 0
      %s16 = sshll.u32 %s0, 4
      %s17 = int_to_ptr.hbm [resolvable:$true] %s16
      %s18 = sshll.u32 [#allocation4], 4
      %s19 = int_to_ptr.vmem [resolvable:$true] %s18
      %24 = dma.hbm_to_vmem [thread:$0]  %s17, 256, %s19, [#allocation5], 64, 64, 4
    $region5: #{tpu_custom_call.1} parent=1 // pred_fallthru
      _
    // Predicated region
    $region6: #{tpu_custom_call.1} parent=1 // pred_check
      _
    $region7: #{tpu_custom_call.1} parent=1 // pred_check_branch
      %26 = sbr.rel (0) target = $region9
    $region8: #{tpu_custom_call.1} parent=1 // pred_region
      %28 = vsyncadd [#allocation8], 0
      %s29 = sshll.u32 %s1, 4
      %s30 = int_to_ptr.hbm [resolvable:$true] %s29
      %s31 = sshll.u32 [#allocation7], 4
      %s32 = int_to_ptr.vmem [resolvable:$true] %s31
      %37 = dma.hbm_to_vmem [thread:$0]  %s30, 256, %s32, [#allocation8], 64, 64, 4
    $region9: #{tpu_custom_call.1} parent=1 // pred_fallthru
      _
    // Predicated region
    $region10: #{tpu_custom_call.1} parent=1 // pred_check
      _
    $region11: #{tpu_custom_call.1} parent=1 // pred_check_branch
      %39 = sbr.rel (0) target = $region13
    $region12: #{tpu_custom_call.1} parent=1 // pred_region
      %41 = vsyncadd [#allocation8], 0
      %s42 = sshll.u32 %s2, 4
      %s43 = int_to_ptr.hbm [resolvable:$true] %s42
      %s44 = sshll.u32 [#allocation9], 4
      %s45 = int_to_ptr.vmem [resolvable:$true] %s44
      %50 = dma.hbm_to_vmem [thread:$0]  %s43, 256, %s45, [#allocation8], 64, 64, 4
    $region13: #{tpu_custom_call.1} parent=1 // pred_fallthru
      _
    // Predicated region
    $region14: #{tpu_custom_call.1} parent=1 // pred_check
      _
    $region15: #{tpu_custom_call.1} parent=1 // pred_check_branch
      %52 = sbr.rel (0) target = $region17
    $region16: #{tpu_custom_call.1} parent=1 // pred_region
      _
    $region17: #{tpu_custom_call.1} parent=1 // pred_fallthru
      _
    // Predicated region
    $region18: #{tpu_custom_call.1} parent=1 // pred_check
      _
    $region19: #{tpu_custom_call.1} parent=1 // pred_check_branch
      %54 = sbr.rel (0) target = $region21
    $region20: #{tpu_custom_call.1} parent=1 // pred_region
      %56 = dma.done [#allocation5], 256
    $region21: #{tpu_custom_call.1} parent=1 // pred_fallthru
      _
    // Predicated region
    $region22: #{tpu_custom_call.1} parent=1 // pred_check
      _
    $region23: #{tpu_custom_call.1} parent=1 // pred_check_branch
      %58 = sbr.rel (0) target = $region25
    $region24: #{tpu_custom_call.1} parent=1 // pred_region
      %60 = dma.done [#allocation8], 256
    $region25: #{tpu_custom_call.1} parent=1 // pred_fallthru
      _
    // Predicated region
    $region26: #{tpu_custom_call.1} parent=1 // pred_check
      _
    $region27: #{tpu_custom_call.1} parent=1 // pred_check_branch
      %62 = sbr.rel (0) target = $region29
    $region28: #{tpu_custom_call.1} parent=1 // pred_region
      %64 = dma.done [#allocation8], 256
    $region29: #{tpu_custom_call.1} parent=1 // pred_fallthru
      _
    %v66 = vld [vmem:[#allocation4] sm:$0xf]
    %v67 = vld [vmem:[#allocation4 + $0x4] sm:$0xf]
    %v68 = vld [vmem:[#allocation4 + $0x8] sm:$0xf]
    %v69 = vld [vmem:[#allocation4 + $0xc] sm:$0xf]
    %v70 = vld [vmem:[#allocation7] sm:$0xf]
    %v71 = vld [vmem:[#allocation7 + $0x4] sm:$0xf]
    %v72 = vld [vmem:[#allocation7 + $0x8] sm:$0xf]
    %v73 = vld [vmem:[#allocation7 + $0xc] sm:$0xf]
    %v78 = vunpack.c.l.b16 %v66
    %v79 = vunpack.c.l.b16 %v67
    %v80 = vunpack.c.l.b16 %v68
    %v81 = vunpack.c.l.b16 %v69
    %v82 = vpack.c.b16 %v79, %v78
    %v83 = vpack.c.b16 %v81, %v80
    %v88 = vunpack.c.l.b16 %v70
    %v89 = vunpack.c.l.b16 %v71
    %v90 = vunpack.c.l.b16 %v72
    %v91 = vunpack.c.l.b16 %v73
    %v92 = vpack.c.b16 %v89, %v88
    %v93 = vpack.c.b16 %v91, %v90
    %vm96 = vcmask 261120
    %v98 = vsel %vm96, %v82, 0
    %v101 = vsel %vm96, %v83, 0
    %103 = vmatpush.bf16.msra.mxu0 0
    %104 = vmatpush.bf16.msra.mxu0 0
    %105 = vmatpush.bf16.msra.mxu0 0
    %106 = vmatpush.bf16.msra.mxu0 0
    %107 = vmatpush.bf16.msra.mxu0 0
    %108 = vmatpush.bf16.msra.mxu0 0
    %109 = vmatpush.bf16.msra.mxu0 %v93
    %110 = vmatpush.bf16.msra.mxu0 %v92
    %111 = vmatmul.bf16.gmra.mxu0 %v98
    %v112 = vpop.f32.mrf.mxu0
    %v113 = vadd.f32 0.0, %v112
    %v114 = vpop.f32.mrf.mxu0
    %v115 = vadd.f32 0.0, %v114
    %116 = vmatmul.bf16.gmra.mxu0 %v101
    %v117 = vpop.f32.mrf.mxu0
    %v118 = vadd.f32 0.0, %v117
    %v119 = vpop.f32.mrf.mxu0
    %v120 = vadd.f32 0.0, %v119
    %121 = vdwg.mxu0
    %v122 = vpack.c.bf16 %v113, %v113
    %v123 = vpack.c.bf16 %v115, %v115
    %v124 = vpack.c.bf16 %v118, %v118
    %v125 = vpack.c.bf16 %v120, %v120
    %vm126 = vcmask 781312
    %127 = vst.msk [vmem:[#allocation2] sm:$0xf] %vm126, %v122
    %128 = vst.msk [vmem:[#allocation2 + $0x4] sm:$0xf] %vm126, %v123
    %129 = vst.msk [vmem:[#allocation2 + $0x8] sm:$0xf] %vm126, %v124
    %130 = vst.msk [vmem:[#allocation2 + $0xc] sm:$0xf] %vm126, %v125
    %v131 = vld [vmem:[#allocation2] sm:$0xf]
    %v132 = vld [vmem:[#allocation2 + $0x4] sm:$0xf]
    %v133 = vld [vmem:[#allocation2 + $0x8] sm:$0xf]
    %v134 = vld [vmem:[#allocation2 + $0xc] sm:$0xf]
    %139 = vrot.lane.b32.xlu0 %v131, 120
    %v140 = vpop.permute.xlu0 %139
    %141 = vrot.lane.b32.xlu0 %v132, 120
    %v142 = vpop.permute.xlu0 %141
    %143 = vrot.lane.b32.xlu0 %v133, 120
    %v144 = vpop.permute.xlu0 %143
    %145 = vrot.lane.b32.xlu0 %v134, 120
    %v146 = vpop.permute.xlu0 %145
    %147 = vrot.lane.b32.xlu0 %v131, 112
    %v148 = vpop.permute.xlu0 %147
    %149 = vrot.lane.b32.xlu0 %v132, 112
    %v150 = vpop.permute.xlu0 %149
    %151 = vrot.lane.b32.xlu0 %v133, 112
    %v152 = vpop.permute.xlu0 %151
    %153 = vrot.lane.b32.xlu0 %v134, 112
    %v154 = vpop.permute.xlu0 %153
    %155 = vrot.lane.b32.xlu0 %v131, 104
    %v156 = vpop.permute.xlu0 %155
    %157 = vrot.lane.b32.xlu0 %v132, 104
    %v158 = vpop.permute.xlu0 %157
    %159 = vrot.lane.b32.xlu0 %v133, 104
    %v160 = vpop.permute.xlu0 %159
    %161 = vrot.lane.b32.xlu0 %v134, 104
    %v162 = vpop.permute.xlu0 %161
    %v163 = vunpack.c.l.b16 %v131
    %v164 = vunpack.c.l.b16 %v132
    %v165 = vpack.c.b16 %v164, %v163
    %166 = vrot.lane.b32.xlu0 %v165, 96
    %v167 = vpop.permute.xlu0 %166
    %vm168 = vcmask 64512
    %v170 = vsel %vm168, %v165, 0
    %v173 = vsel %vm168, %v167, 0
    %175 = vmatpush.bf16.xpose.msra.mxu0 0
    %176 = vmatpush.bf16.xpose.msra.mxu0 0
    %177 = vmatpush.bf16.xpose.msra.mxu0 0
    %178 = vmatpush.bf16.xpose.msra.mxu0 0
    %179 = vmatpush.bf16.xpose.msra.mxu0 0
    %180 = vmatpush.bf16.xpose.msra.mxu0 0
    %181 = vmatpush.bf16.xpose.msra.mxu0 0
    %182 = vmatpush.bf16.xpose.msra.mxu0 %v173
    %183 = vmatmul.bf16.gmra.mxu0 %v170
    %v184 = vpop.f32.mrf.mxu0
    %v185 = vadd.f32 0.0, %v184
    %v186 = vpop.f32.mrf.mxu0
    %v187 = vadd.f32 0.0, %v186
    %188 = vdwg.mxu0
    %v189 = vunpack.c.l.b16 %v133
    %v190 = vunpack.c.l.b16 %v134
    %v191 = vpack.c.b16 %v190, %v189
    %192 = vrot.lane.b32.xlu0 %v191, 96
    %v193 = vpop.permute.xlu0 %192
    %v195 = vsel %vm168, %v191, 0
    %v198 = vsel %vm168, %v193, 0
    %200 = vmatpush.bf16.xpose.msra.mxu0 0
    %201 = vmatpush.bf16.xpose.msra.mxu0 0
    %202 = vmatpush.bf16.xpose.msra.mxu0 0
    %203 = vmatpush.bf16.xpose.msra.mxu0 0
    %204 = vmatpush.bf16.xpose.msra.mxu0 0
    %205 = vmatpush.bf16.xpose.msra.mxu0 0
    %206 = vmatpush.bf16.xpose.msra.mxu0 0
    %207 = vmatpush.bf16.xpose.msra.mxu0 %v198
    %208 = vmatmul.bf16.gmra.mxu0 %v195
    %v209 = vpop.f32.mrf.mxu0
    %v210 = vadd.f32 0.0, %v209
    %v211 = vpop.f32.mrf.mxu0
    %v212 = vadd.f32 0.0, %v211
    %213 = vdwg.mxu0
    %v214 = vunpack.c.l.b16 %v140
    %v215 = vunpack.c.l.b16 %v142
    %v216 = vpack.c.b16 %v215, %v214
    %217 = vrot.lane.b32.xlu0 %v216, 96
    %v218 = vpop.permute.xlu0 %217
    %v220 = vsel %vm168, %v216, 0
    %v223 = vsel %vm168, %v218, 0
    %225 = vmatpush.bf16.xpose.msra.mxu0 0
    %226 = vmatpush.bf16.xpose.msra.mxu0 0
    %227 = vmatpush.bf16.xpose.msra.mxu0 0
    %228 = vmatpush.bf16.xpose.msra.mxu0 0
    %229 = vmatpush.bf16.xpose.msra.mxu0 0
    %230 = vmatpush.bf16.xpose.msra.mxu0 0
    %231 = vmatpush.bf16.xpose.msra.mxu0 0
    %232 = vmatpush.bf16.xpose.msra.mxu0 %v223
    %233 = vmatmul.bf16.gmra.mxu0 %v220
    %v234 = vpop.f32.mrf.mxu0
    %v235 = vadd.f32 0.0, %v234
    %v236 = vpop.f32.mrf.mxu0
    %v237 = vadd.f32 0.0, %v236
    %238 = vdwg.mxu0
    %v239 = vunpack.c.l.b16 %v144
    %v240 = vunpack.c.l.b16 %v146
    %v241 = vpack.c.b16 %v240, %v239
    %242 = vrot.lane.b32.xlu0 %v241, 96
    %v243 = vpop.permute.xlu0 %242
    %v245 = vsel %vm168, %v241, 0
    %v248 = vsel %vm168, %v243, 0
    %250 = vmatpush.bf16.xpose.msra.mxu0 0
    %251 = vmatpush.bf16.xpose.msra.mxu0 0
    %252 = vmatpush.bf16.xpose.msra.mxu0 0
    %253 = vmatpush.bf16.xpose.msra.mxu0 0
    %254 = vmatpush.bf16.xpose.msra.mxu0 0
    %255 = vmatpush.bf16.xpose.msra.mxu0 0
    %256 = vmatpush.bf16.xpose.msra.mxu0 0
    %257 = vmatpush.bf16.xpose.msra.mxu0 %v248
    %258 = vmatmul.bf16.gmra.mxu0 %v245
    %v259 = vpop.f32.mrf.mxu0
    %v260 = vadd.f32 0.0, %v259
    %v261 = vpop.f32.mrf.mxu0
    %v262 = vadd.f32 0.0, %v261
    %263 = vdwg.mxu0
    %v264 = vunpack.c.l.b16 %v148
    %v265 = vunpack.c.l.b16 %v150
    %v266 = vpack.c.b16 %v265, %v264
    %267 = vrot.lane.b32.xlu0 %v266, 96
    %v268 = vpop.permute.xlu0 %267
    %v270 = vsel %vm168, %v266, 0
    %v273 = vsel %vm168, %v268, 0
    %275 = vmatpush.bf16.xpose.msra.mxu0 0
    %276 = vmatpush.bf16.xpose.msra.mxu0 0
    %277 = vmatpush.bf16.xpose.msra.mxu0 0
    %278 = vmatpush.bf16.xpose.msra.mxu0 0
    %279 = vmatpush.bf16.xpose.msra.mxu0 0
    %280 = vmatpush.bf16.xpose.msra.mxu0 0
    %281 = vmatpush.bf16.xpose.msra.mxu0 0
    %282 = vmatpush.bf16.xpose.msra.mxu0 %v273
    %283 = vmatmul.bf16.gmra.mxu0 %v270
    %v284 = vpop.f32.mrf.mxu0
    %v285 = vadd.f32 0.0, %v284
    %v286 = vpop.f32.mrf.mxu0
    %v287 = vadd.f32 0.0, %v286
    %288 = vdwg.mxu0
    %v289 = vunpack.c.l.b16 %v152
    %v290 = vunpack.c.l.b16 %v154
    %v291 = vpack.c.b16 %v290, %v289
    %292 = vrot.lane.b32.xlu0 %v291, 96
    %v293 = vpop.permute.xlu0 %292
    %v295 = vsel %vm168, %v291, 0
    %v298 = vsel %vm168, %v293, 0
    %300 = vmatpush.bf16.xpose.msra.mxu0 0
    %301 = vmatpush.bf16.xpose.msra.mxu0 0
    %302 = vmatpush.bf16.xpose.msra.mxu0 0
    %303 = vmatpush.bf16.xpose.msra.mxu0 0
    %304 = vmatpush.bf16.xpose.msra.mxu0 0
    %305 = vmatpush.bf16.xpose.msra.mxu0 0
    %306 = vmatpush.bf16.xpose.msra.mxu0 0
    %307 = vmatpush.bf16.xpose.msra.mxu0 %v298
    %308 = vmatmul.bf16.gmra.mxu0 %v295
    %v309 = vpop.f32.mrf.mxu0
    %v310 = vadd.f32 0.0, %v309
    %v311 = vpop.f32.mrf.mxu0
    %v312 = vadd.f32 0.0, %v311
    %313 = vdwg.mxu0
    %v314 = vunpack.c.l.b16 %v156
    %v315 = vunpack.c.l.b16 %v158
    %v316 = vpack.c.b16 %v315, %v314
    %317 = vrot.lane.b32.xlu0 %v316, 96
    %v318 = vpop.permute.xlu0 %317
    %v320 = vsel %vm168, %v316, 0
    %v323 = vsel %vm168, %v318, 0
    %325 = vmatpush.bf16.xpose.msra.mxu0 0
    %326 = vmatpush.bf16.xpose.msra.mxu0 0
    %327 = vmatpush.bf16.xpose.msra.mxu0 0
    %328 = vmatpush.bf16.xpose.msra.mxu0 0
    %329 = vmatpush.bf16.xpose.msra.mxu0 0
    %330 = vmatpush.bf16.xpose.msra.mxu0 0
    %331 = vmatpush.bf16.xpose.msra.mxu0 0
    %332 = vmatpush.bf16.xpose.msra.mxu0 %v323
    %333 = vmatmul.bf16.gmra.mxu0 %v320
    %v334 = vpop.f32.mrf.mxu0
    %v335 = vadd.f32 0.0, %v334
    %v336 = vpop.f32.mrf.mxu0
    %v337 = vadd.f32 0.0, %v336
    %338 = vdwg.mxu0
    %v339 = vunpack.c.l.b16 %v160
    %v340 = vunpack.c.l.b16 %v162
    %v341 = vpack.c.b16 %v340, %v339
    %342 = vrot.lane.b32.xlu0 %v341, 96
    %v343 = vpop.permute.xlu0 %342
    %v345 = vsel %vm168, %v341, 0
    %v348 = vsel %vm168, %v343, 0
    %350 = vmatpush.bf16.xpose.msra.mxu0 0
    %351 = vmatpush.bf16.xpose.msra.mxu0 0
    %352 = vmatpush.bf16.xpose.msra.mxu0 0
    %353 = vmatpush.bf16.xpose.msra.mxu0 0
    %354 = vmatpush.bf16.xpose.msra.mxu0 0
    %355 = vmatpush.bf16.xpose.msra.mxu0 0
    %356 = vmatpush.bf16.xpose.msra.mxu0 0
    %357 = vmatpush.bf16.xpose.msra.mxu0 %v348
    %358 = vmatmul.bf16.gmra.mxu0 %v345
    %v359 = vpop.f32.mrf.mxu0
    %v360 = vadd.f32 0.0, %v359
    %v361 = vpop.f32.mrf.mxu0
    %v362 = vadd.f32 0.0, %v361
    %363 = vdwg.mxu0
    %vm364 = vcmask 130048
    %v365 = vsel %vm364, %v185, -inf
    %366 = vmax.xlane.f32.xlu0 %v365
    %v367 = vpop.xlane.xlu0 %366
    %v368 = vsel %vm364, %v187, -inf
    %369 = vmax.xlane.f32.xlu0 %v368
    %v370 = vpop.xlane.xlu0 %369
    %v371 = vsel %vm364, %v210, -inf
    %372 = vmax.xlane.f32.xlu0 %v371
    %v373 = vpop.xlane.xlu0 %372
    %v374 = vsel %vm364, %v212, -inf
    %375 = vmax.xlane.f32.xlu0 %v374
    %v376 = vpop.xlane.xlu0 %375
    %v377 = vsel %vm364, %v235, -inf
    %378 = vmax.xlane.f32.xlu0 %v377
    %v379 = vpop.xlane.xlu0 %378
    %v380 = vsel %vm364, %v237, -inf
    %381 = vmax.xlane.f32.xlu0 %v380
    %v382 = vpop.xlane.xlu0 %381
    %v383 = vsel %vm364, %v260, -inf
    %384 = vmax.xlane.f32.xlu0 %v383
    %v385 = vpop.xlane.xlu0 %384
    %v386 = vsel %vm364, %v262, -inf
    %387 = vmax.xlane.f32.xlu0 %v386
    %v388 = vpop.xlane.xlu0 %387
    %v389 = vsel %vm364, %v285, -inf
    %390 = vmax.xlane.f32.xlu0 %v389
    %v391 = vpop.xlane.xlu0 %390
    %v392 = vsel %vm364, %v287, -inf
    %393 = vmax.xlane.f32.xlu0 %v392
    %v394 = vpop.xlane.xlu0 %393
    %v395 = vsel %vm364, %v310, -inf
    %396 = vmax.xlane.f32.xlu0 %v395
    %v397 = vpop.xlane.xlu0 %396
    %v398 = vsel %vm364, %v312, -inf
    %399 = vmax.xlane.f32.xlu0 %v398
    %v400 = vpop.xlane.xlu0 %399
    %v401 = vsel %vm364, %v335, -inf
    %402 = vmax.xlane.f32.xlu0 %v401
    %v403 = vpop.xlane.xlu0 %402
    %v404 = vsel %vm364, %v337, -inf
    %405 = vmax.xlane.f32.xlu0 %v404
    %v406 = vpop.xlane.xlu0 %405
    %v407 = vsel %vm364, %v360, -inf
    %408 = vmax.xlane.f32.xlu0 %v407
    %v409 = vpop.xlane.xlu0 %408
    %v410 = vsel %vm364, %v362, -inf
    %411 = vmax.xlane.f32.xlu0 %v410
    %v412 = vpop.xlane.xlu0 %411
    %v413 = vsub.f32 %v185, %v367
    %v414 = vsub.f32 %v187, %v370
    %v415 = vsub.f32 %v210, %v373
    %v416 = vsub.f32 %v212, %v376
    %v417 = vsub.f32 %v235, %v379
    %v418 = vsub.f32 %v237, %v382
    %v419 = vsub.f32 %v260, %v385
    %v420 = vsub.f32 %v262, %v388
    %v421 = vsub.f32 %v285, %v391
    %v422 = vsub.f32 %v287, %v394
    %v423 = vsub.f32 %v310, %v397
    %v424 = vsub.f32 %v312, %v400
    %v425 = vsub.f32 %v335, %v403
    %v426 = vsub.f32 %v337, %v406
    %v427 = vsub.f32 %v360, %v409
    %v428 = vsub.f32 %v362, %v412
    %v429 = vmul.f32 %v413, 1.442695
    %v430 = vpow.pop %v429
    %v431 = vmul.f32 %v414, 1.442695
    %v432 = vpow.pop %v431
    %v433 = vmul.f32 %v415, 1.442695
    %v434 = vpow.pop %v433
    %v435 = vmul.f32 %v416, 1.442695
    %v436 = vpow.pop %v435
    %v437 = vmul.f32 %v417, 1.442695
    %v438 = vpow.pop %v437
    %v439 = vmul.f32 %v418, 1.442695
    %v440 = vpow.pop %v439
    %v441 = vmul.f32 %v419, 1.442695
    %v442 = vpow.pop %v441
    %v443 = vmul.f32 %v420, 1.442695
    %v444 = vpow.pop %v443
    %v445 = vmul.f32 %v421, 1.442695
    %v446 = vpow.pop %v445
    %v447 = vmul.f32 %v422, 1.442695
    %v448 = vpow.pop %v447
    %v449 = vmul.f32 %v423, 1.442695
    %v450 = vpow.pop %v449
    %v451 = vmul.f32 %v424, 1.442695
    %v452 = vpow.pop %v451
    %v453 = vmul.f32 %v425, 1.442695
    %v454 = vpow.pop %v453
    %v455 = vmul.f32 %v426, 1.442695
    %v456 = vpow.pop %v455
    %v457 = vmul.f32 %v427, 1.442695
    %v458 = vpow.pop %v457
    %v459 = vmul.f32 %v428, 1.442695
    %v460 = vpow.pop %v459
    %v461 = vsel %vm364, %v430, 0.0
    %462 = vadd.xlane.f32.xlu0 %v461
    %v463 = vpop.xlane.xlu0 %462
    %v464 = vsel %vm364, %v432, 0.0
    %465 = vadd.xlane.f32.xlu0 %v464
    %v466 = vpop.xlane.xlu0 %465
    %v467 = vsel %vm364, %v434, 0.0
    %468 = vadd.xlane.f32.xlu0 %v467
    %v469 = vpop.xlane.xlu0 %468
    %v470 = vsel %vm364, %v436, 0.0
    %471 = vadd.xlane.f32.xlu0 %v470
    %v472 = vpop.xlane.xlu0 %471
    %v473 = vsel %vm364, %v438, 0.0
    %474 = vadd.xlane.f32.xlu0 %v473
    %v475 = vpop.xlane.xlu0 %474
    %v476 = vsel %vm364, %v440, 0.0
    %477 = vadd.xlane.f32.xlu0 %v476
    %v478 = vpop.xlane.xlu0 %477
    %v479 = vsel %vm364, %v442, 0.0
    %480 = vadd.xlane.f32.xlu0 %v479
    %v481 = vpop.xlane.xlu0 %480
    %v482 = vsel %vm364, %v444, 0.0
    %483 = vadd.xlane.f32.xlu0 %v482
    %v484 = vpop.xlane.xlu0 %483
    %v485 = vsel %vm364, %v446, 0.0
    %486 = vadd.xlane.f32.xlu0 %v485
    %v487 = vpop.xlane.xlu0 %486
    %v488 = vsel %vm364, %v448, 0.0
    %489 = vadd.xlane.f32.xlu0 %v488
    %v490 = vpop.xlane.xlu0 %489
    %v491 = vsel %vm364, %v450, 0.0
    %492 = vadd.xlane.f32.xlu0 %v491
    %v493 = vpop.xlane.xlu0 %492
    %v494 = vsel %vm364, %v452, 0.0
    %495 = vadd.xlane.f32.xlu0 %v494
    %v496 = vpop.xlane.xlu0 %495
    %v497 = vsel %vm364, %v454, 0.0
    %498 = vadd.xlane.f32.xlu0 %v497
    %v499 = vpop.xlane.xlu0 %498
    %v500 = vsel %vm364, %v456, 0.0
    %501 = vadd.xlane.f32.xlu0 %v500
    %v502 = vpop.xlane.xlu0 %501
    %v503 = vsel %vm364, %v458, 0.0
    %504 = vadd.xlane.f32.xlu0 %v503
    %v505 = vpop.xlane.xlu0 %504
    %v506 = vsel %vm364, %v460, 0.0
    %507 = vadd.xlane.f32.xlu0 %v506
    %v508 = vpop.xlane.xlu0 %507
    %v509 = vrcp.pop %v463
    %v510 = vrcp.pop %v466
    %v511 = vrcp.pop %v469
    %v512 = vrcp.pop %v472
    %v513 = vrcp.pop %v475
    %v514 = vrcp.pop %v478
    %v515 = vrcp.pop %v481
    %v516 = vrcp.pop %v484
    %v517 = vrcp.pop %v487
    %v518 = vrcp.pop %v490
    %v519 = vrcp.pop %v493
    %v520 = vrcp.pop %v496
    %v521 = vrcp.pop %v499
    %v522 = vrcp.pop %v502
    %v523 = vrcp.pop %v505
    %v524 = vrcp.pop %v508
    %v525 = vmul.f32 %v430, %v509
    %v526 = vmul.f32 %v432, %v510
    %v527 = vmul.f32 %v434, %v511
    %v528 = vmul.f32 %v436, %v512
    %v529 = vmul.f32 %v438, %v513
    %v530 = vmul.f32 %v440, %v514
    %v531 = vmul.f32 %v442, %v515
    %v532 = vmul.f32 %v444, %v516
    %v533 = vmul.f32 %v446, %v517
    %v534 = vmul.f32 %v448, %v518
    %v535 = vmul.f32 %v450, %v519
    %v536 = vmul.f32 %v452, %v520
    %v537 = vmul.f32 %v454, %v521
    %v538 = vmul.f32 %v456, %v522
    %v539 = vmul.f32 %v458, %v523
    %v540 = vmul.f32 %v460, %v524
    %v541 = vpack.c.bf16 %v525, %v525
    %v542 = vpack.c.bf16 %v526, %v526
    %v543 = vpack.c.bf16 %v527, %v527
    %v544 = vpack.c.bf16 %v528, %v528
    %v545 = vpack.c.bf16 %v529, %v529
    %v546 = vpack.c.bf16 %v530, %v530
    %v547 = vpack.c.bf16 %v531, %v531
    %v548 = vpack.c.bf16 %v532, %v532
    %v549 = vpack.c.bf16 %v533, %v533
    %v550 = vpack.c.bf16 %v534, %v534
    %v551 = vpack.c.bf16 %v535, %v535
    %v552 = vpack.c.bf16 %v536, %v536
    %v553 = vpack.c.bf16 %v537, %v537
    %v554 = vpack.c.bf16 %v538, %v538
    %v555 = vpack.c.bf16 %v539, %v539
    %v556 = vpack.c.bf16 %v540, %v540
    %v559 = vunpack.c.l.b16 %v541
    %v560 = vunpack.c.l.b16 %v542
    %v561 = vpack.c.b16 %v560, %v559
    %562 = vrot.lane.b32.xlu0 %v165, 64
    %v563 = vpop.permute.xlu0 %562
    %v566 = vsel %vm364, %v561, 0
    %568 = vmatpush.bf16.msra.mxu0 0
    %569 = vmatpush.bf16.msra.mxu0 0
    %570 = vmatpush.bf16.msra.mxu0 0
    %571 = vmatpush.bf16.msra.mxu0 0
    %572 = vmatpush.bf16.msra.mxu0 0
    %573 = vmatpush.bf16.msra.mxu0 0
    %574 = vmatpush.bf16.msra.mxu0 0
    %575 = vmatpush.bf16.msra.mxu0 %v563
    %576 = vmatmul.bf16.gmra.mxu0 %v566
    %v577 = vpop.f32.mrf.mxu0
    %v578 = vadd.f32 0.0, %v577
    %v579 = vpop.f32.mrf.mxu0
    %v580 = vadd.f32 0.0, %v579
    %581 = vdwg.mxu0
    %v584 = vunpack.c.l.b16 %v543
    %v585 = vunpack.c.l.b16 %v544
    %v586 = vpack.c.b16 %v585, %v584
    %587 = vrot.lane.b32.xlu0 %v191, 64
    %v588 = vpop.permute.xlu0 %587
    %v591 = vsel %vm364, %v586, 0
    %593 = vmatpush.bf16.msra.mxu0 0
    %594 = vmatpush.bf16.msra.mxu0 0
    %595 = vmatpush.bf16.msra.mxu0 0
    %596 = vmatpush.bf16.msra.mxu0 0
    %597 = vmatpush.bf16.msra.mxu0 0
    %598 = vmatpush.bf16.msra.mxu0 0
    %599 = vmatpush.bf16.msra.mxu0 0
    %600 = vmatpush.bf16.msra.mxu0 %v588
    %601 = vmatmul.bf16.gmra.mxu0 %v591
    %v602 = vpop.f32.mrf.mxu0
    %v603 = vadd.f32 0.0, %v602
    %v604 = vpop.f32.mrf.mxu0
    %v605 = vadd.f32 0.0, %v604
    %606 = vdwg.mxu0
    %v609 = vunpack.c.l.b16 %v545
    %v610 = vunpack.c.l.b16 %v546
    %v611 = vpack.c.b16 %v610, %v609
    %612 = vrot.lane.b32.xlu0 %v216, 64
    %v613 = vpop.permute.xlu0 %612
    %v616 = vsel %vm364, %v611, 0
    %618 = vmatpush.bf16.msra.mxu0 0
    %619 = vmatpush.bf16.msra.mxu0 0
    %620 = vmatpush.bf16.msra.mxu0 0
    %621 = vmatpush.bf16.msra.mxu0 0
    %622 = vmatpush.bf16.msra.mxu0 0
    %623 = vmatpush.bf16.msra.mxu0 0
    %624 = vmatpush.bf16.msra.mxu0 0
    %625 = vmatpush.bf16.msra.mxu0 %v613
    %626 = vmatmul.bf16.gmra.mxu0 %v616
    %v627 = vpop.f32.mrf.mxu0
    %v628 = vadd.f32 0.0, %v627
    %v629 = vpop.f32.mrf.mxu0
    %v630 = vadd.f32 0.0, %v629
    %631 = vdwg.mxu0
    %v634 = vunpack.c.l.b16 %v547
    %v635 = vunpack.c.l.b16 %v548
    %v636 = vpack.c.b16 %v635, %v634
    %637 = vrot.lane.b32.xlu0 %v241, 64
    %v638 = vpop.permute.xlu0 %637
    %v641 = vsel %vm364, %v636, 0
    %643 = vmatpush.bf16.msra.mxu0 0
    %644 = vmatpush.bf16.msra.mxu0 0
    %645 = vmatpush.bf16.msra.mxu0 0
    %646 = vmatpush.bf16.msra.mxu0 0
    %647 = vmatpush.bf16.msra.mxu0 0
    %648 = vmatpush.bf16.msra.mxu0 0
    %649 = vmatpush.bf16.msra.mxu0 0
    %650 = vmatpush.bf16.msra.mxu0 %v638
    %651 = vmatmul.bf16.gmra.mxu0 %v641
    %v652 = vpop.f32.mrf.mxu0
    %v653 = vadd.f32 0.0, %v652
    %v654 = vpop.f32.mrf.mxu0
    %v655 = vadd.f32 0.0, %v654
    %656 = vdwg.mxu0
    %v659 = vunpack.c.l.b16 %v549
    %v660 = vunpack.c.l.b16 %v550
    %v661 = vpack.c.b16 %v660, %v659
    %662 = vrot.lane.b32.xlu0 %v266, 64
    %v663 = vpop.permute.xlu0 %662
    %v666 = vsel %vm364, %v661, 0
    %668 = vmatpush.bf16.msra.mxu0 0
    %669 = vmatpush.bf16.msra.mxu0 0
    %670 = vmatpush.bf16.msra.mxu0 0
    %671 = vmatpush.bf16.msra.mxu0 0
    %672 = vmatpush.bf16.msra.mxu0 0
    %673 = vmatpush.bf16.msra.mxu0 0
    %674 = vmatpush.bf16.msra.mxu0 0
    %675 = vmatpush.bf16.msra.mxu0 %v663
    %676 = vmatmul.bf16.gmra.mxu0 %v666
    %v677 = vpop.f32.mrf.mxu0
    %v678 = vadd.f32 0.0, %v677
    %v679 = vpop.f32.mrf.mxu0
    %v680 = vadd.f32 0.0, %v679
    %681 = vdwg.mxu0
    %v684 = vunpack.c.l.b16 %v551
    %v685 = vunpack.c.l.b16 %v552
    %v686 = vpack.c.b16 %v685, %v684
    %687 = vrot.lane.b32.xlu0 %v291, 64
    %v688 = vpop.permute.xlu0 %687
    %v691 = vsel %vm364, %v686, 0
    %693 = vmatpush.bf16.msra.mxu0 0
    %694 = vmatpush.bf16.msra.mxu0 0
    %695 = vmatpush.bf16.msra.mxu0 0
    %696 = vmatpush.bf16.msra.mxu0 0
    %697 = vmatpush.bf16.msra.mxu0 0
    %698 = vmatpush.bf16.msra.mxu0 0
    %699 = vmatpush.bf16.msra.mxu0 0
    %700 = vmatpush.bf16.msra.mxu0 %v688
    %701 = vmatmul.bf16.gmra.mxu0 %v691
    %v702 = vpop.f32.mrf.mxu0
    %v703 = vadd.f32 0.0, %v702
    %v704 = vpop.f32.mrf.mxu0
    %v705 = vadd.f32 0.0, %v704
    %706 = vdwg.mxu0
    %v709 = vunpack.c.l.b16 %v553
    %v710 = vunpack.c.l.b16 %v554
    %v711 = vpack.c.b16 %v710, %v709
    %712 = vrot.lane.b32.xlu0 %v316, 64
    %v713 = vpop.permute.xlu0 %712
    %v716 = vsel %vm364, %v711, 0
    %718 = vmatpush.bf16.msra.mxu0 0
    %719 = vmatpush.bf16.msra.mxu0 0
    %720 = vmatpush.bf16.msra.mxu0 0
    %721 = vmatpush.bf16.msra.mxu0 0
    %722 = vmatpush.bf16.msra.mxu0 0
    %723 = vmatpush.bf16.msra.mxu0 0
    %724 = vmatpush.bf16.msra.mxu0 0
    %725 = vmatpush.bf16.msra.mxu0 %v713
    %726 = vmatmul.bf16.gmra.mxu0 %v716
    %v727 = vpop.f32.mrf.mxu0
    %v728 = vadd.f32 0.0, %v727
    %v729 = vpop.f32.mrf.mxu0
    %v730 = vadd.f32 0.0, %v729
    %731 = vdwg.mxu0
    %v734 = vunpack.c.l.b16 %v555
    %v735 = vunpack.c.l.b16 %v556
    %v736 = vpack.c.b16 %v735, %v734
    %737 = vrot.lane.b32.xlu0 %v341, 64
    %v738 = vpop.permute.xlu0 %737
    %v741 = vsel %vm364, %v736, 0
    %743 = vmatpush.bf16.msra.mxu0 0
    %744 = vmatpush.bf16.msra.mxu0 0
    %745 = vmatpush.bf16.msra.mxu0 0
    %746 = vmatpush.bf16.msra.mxu0 0
    %747 = vmatpush.bf16.msra.mxu0 0
    %748 = vmatpush.bf16.msra.mxu0 0
    %749 = vmatpush.bf16.msra.mxu0 0
    %750 = vmatpush.bf16.msra.mxu0 %v738
    %751 = vmatmul.bf16.gmra.mxu0 %v741
    %v752 = vpop.f32.mrf.mxu0
    %v753 = vadd.f32 0.0, %v752
    %v754 = vpop.f32.mrf.mxu0
    %v755 = vadd.f32 0.0, %v754
    %756 = vdwg.mxu0
    %v757 = vpack.c.bf16 %v578, %v578
    %v758 = vpack.c.bf16 %v580, %v580
    %v759 = vpack.c.bf16 %v603, %v603
    %v760 = vpack.c.bf16 %v605, %v605
    %v761 = vpack.c.bf16 %v628, %v628
    %v762 = vpack.c.bf16 %v630, %v630
    %v763 = vpack.c.bf16 %v653, %v653
    %v764 = vpack.c.bf16 %v655, %v655
    %v765 = vpack.c.bf16 %v678, %v678
    %v766 = vpack.c.bf16 %v680, %v680
    %v767 = vpack.c.bf16 %v703, %v703
    %v768 = vpack.c.bf16 %v705, %v705
    %v769 = vpack.c.bf16 %v728, %v728
    %v770 = vpack.c.bf16 %v730, %v730
    %v771 = vpack.c.bf16 %v753, %v753
    %v772 = vpack.c.bf16 %v755, %v755
    %vm773 = vcmask 60416
    %774 = vst.msk [vmem:[#allocation3] sm:$0xf] %vm773, %v757
    %775 = vst.msk [vmem:[#allocation3 + $0x4] sm:$0xf] %vm773, %v758
    %776 = vst.msk [vmem:[#allocation3 + $0x8] sm:$0xf] %vm773, %v759
    %777 = vst.msk [vmem:[#allocation3 + $0xc] sm:$0xf] %vm773, %v760
    %782 = vrot.lane.b32.xlu0 %v761, 8
    %v783 = vpop.permute.xlu0 %782
    %784 = vrot.lane.b32.xlu0 %v762, 8
    %v785 = vpop.permute.xlu0 %784
    %786 = vrot.lane.b32.xlu0 %v763, 8
    %v787 = vpop.permute.xlu0 %786
    %788 = vrot.lane.b32.xlu0 %v764, 8
    %v789 = vpop.permute.xlu0 %788
    %vm794 = vcmask 126016
    %795 = vst.msk [vmem:[#allocation3] sm:$0xf] %vm794, %v783
    %796 = vst.msk [vmem:[#allocation3 + $0x4] sm:$0xf] %vm794, %v785
    %797 = vst.msk [vmem:[#allocation3 + $0x8] sm:$0xf] %vm794, %v787
    %798 = vst.msk [vmem:[#allocation3 + $0xc] sm:$0xf] %vm794, %v789
    %803 = vrot.lane.b32.xlu0 %v765, 16
    %v804 = vpop.permute.xlu0 %803
    %805 = vrot.lane.b32.xlu0 %v766, 16
    %v806 = vpop.permute.xlu0 %805
    %807 = vrot.lane.b32.xlu0 %v767, 16
    %v808 = vpop.permute.xlu0 %807
    %809 = vrot.lane.b32.xlu0 %v768, 16
    %v810 = vpop.permute.xlu0 %809
    %vm815 = vcmask 191616
    %816 = vst.msk [vmem:[#allocation3] sm:$0xf] %vm815, %v804
    %817 = vst.msk [vmem:[#allocation3 + $0x4] sm:$0xf] %vm815, %v806
    %818 = vst.msk [vmem:[#allocation3 + $0x8] sm:$0xf] %vm815, %v808
    %819 = vst.msk [vmem:[#allocation3 + $0xc] sm:$0xf] %vm815, %v810
    %824 = vrot.lane.b32.xlu0 %v769, 24
    %v825 = vpop.permute.xlu0 %824
    %826 = vrot.lane.b32.xlu0 %v770, 24
    %v827 = vpop.permute.xlu0 %826
    %828 = vrot.lane.b32.xlu0 %v771, 24
    %v829 = vpop.permute.xlu0 %828
    %830 = vrot.lane.b32.xlu0 %v772, 24
    %v831 = vpop.permute.xlu0 %830
    %vm836 = vcmask 257216
    %837 = vst.msk [vmem:[#allocation3] sm:$0xf] %vm836, %v825
    %838 = vst.msk [vmem:[#allocation3 + $0x4] sm:$0xf] %vm836, %v827
    %839 = vst.msk [vmem:[#allocation3 + $0x8] sm:$0xf] %vm836, %v829
    %840 = vst.msk [vmem:[#allocation3 + $0xc] sm:$0xf] %vm836, %v831
    %v841 = vld [vmem:[#allocation3] sm:$0xf]
    %v842 = vld [vmem:[#allocation3 + $0x4] sm:$0xf]
    %v843 = vld [vmem:[#allocation3 + $0x8] sm:$0xf]
    %v844 = vld [vmem:[#allocation3 + $0xc] sm:$0xf]
    %v845 = vld [vmem:[#allocation9] sm:$0xf]
    %v846 = vld [vmem:[#allocation9 + $0x4] sm:$0xf]
    %v847 = vld [vmem:[#allocation9 + $0x8] sm:$0xf]
    %v848 = vld [vmem:[#allocation9 + $0xc] sm:$0xf]
    %v849 = vld [vmem:[%s3] sm:$0x1]
    %v851 = vperm.slane %v849, 0
    %v857 = vunpack.c.l.b16 %v841
    %v858 = vunpack.c.l.b16 %v842
    %v859 = vunpack.c.l.b16 %v843
    %v860 = vunpack.c.l.b16 %v844
    %v861 = vpack.c.b16 %v858, %v857
    %v862 = vpack.c.b16 %v860, %v859
    %v867 = vunpack.c.l.b16 %v845
    %v868 = vunpack.c.l.b16 %v846
    %v869 = vunpack.c.l.b16 %v847
    %v870 = vunpack.c.l.b16 %v848
    %v871 = vpack.c.b16 %v868, %v867
    %v872 = vpack.c.b16 %v870, %v869
    %v876 = vsel %vm96, %v861, 0
    %v879 = vsel %vm96, %v862, 0
    %881 = vmatpush.bf16.msra.mxu0 0
    %882 = vmatpush.bf16.msra.mxu0 0
    %883 = vmatpush.bf16.msra.mxu0 0
    %884 = vmatpush.bf16.msra.mxu0 0
    %885 = vmatpush.bf16.msra.mxu0 0
    %886 = vmatpush.bf16.msra.mxu0 0
    %887 = vmatpush.bf16.msra.mxu0 %v872
    %888 = vmatpush.bf16.msra.mxu0 %v871
    %889 = vmatmul.bf16.gmra.mxu0 %v876
    %v890 = vpop.f32.mrf.mxu0
    %v891 = vadd.f32 %v851, %v890
    %v892 = vpop.f32.mrf.mxu0
    %v893 = vadd.f32 %v851, %v892
    %894 = vmatmul.bf16.gmra.mxu0 %v879
    %v895 = vpop.f32.mrf.mxu0
    %v896 = vadd.f32 %v851, %v895
    %v897 = vpop.f32.mrf.mxu0
    %v898 = vadd.f32 %v851, %v897
    %899 = vdwg.mxu0
    %900 = vst.msk [vmem:[#allocation10] sm:$0xff] %vm96, %v891
    %901 = vst.msk [vmem:[#allocation10 + $0x8] sm:$0xff] %vm96, %v893
    %902 = vst.msk [vmem:[#allocation10 + $0x10] sm:$0xff] %vm96, %v896
    %903 = vst.msk [vmem:[#allocation10 + $0x18] sm:$0xff] %vm96, %v898
    // Predicated region
    $region30: #{tpu_custom_call.1} parent=1 // pred_check
      _
    $region31: #{tpu_custom_call.1} parent=1 // pred_check_branch
      %905 = sbr.rel (0) target = $region33
    $region32: #{tpu_custom_call.1} parent=1 // pred_region
      %907 = vsyncadd [#allocation6], 0
      %s908 = sshll.u32 [#allocation10], 4
      %s909 = int_to_ptr.vmem [resolvable:$true] %s908
      %s910 = sshll.u32 %s4, 4
      %s911 = int_to_ptr.hbm [resolvable:$true] %s910
      %916 = dma.vmem_to_hbm [thread:$0]  %s909, 512, %s911, [#allocation6], 128, 128, 8
    $region33: #{tpu_custom_call.1} parent=1 // pred_fallthru
      _
    // Predicated region
    $region34: #{tpu_custom_call.1} parent=1 // pred_check
      _
    $region35: #{tpu_custom_call.1} parent=1 // pred_check_branch
      %918 = sbr.rel (0) target = $region37
    $region36: #{tpu_custom_call.1} parent=1 // pred_region
      %920 = dma.done [#allocation6], 512
    $region37: #{tpu_custom_call.1} parent=1 // pred_fallthru
      _
    %921 = vsyncpa [#allocation5], 1
    %922 = vsyncpa [#allocation8], 1
    %923 = vsyncpa [#allocation6], 1

</llo_original>
